<compile_context>
chip_gen: v5e
topology: v5e:2x2
jax: 0.10.0
libtpu: 0.0.40
codegen_flags: <defaults>
</compile_context>

<pallas_src>
import functools
import math

import jax
import jax.numpy as jnp
from jax.experimental import pallas as pl
from jax.experimental.pallas import tpu as pltpu


def _round_up(v, m):
    return -(-v // m) * m


def _paa_kernel(mask_ref, x_ref, y_ref, wq_ref, wk_ref, wv_ref,
                wfc_ref, bfc_ref, gamma_ref, beta_ref, out_ref,
                *, norm_fact, pooling, eps, n_valid, d_valid):
    x = x_ref[...]            # (bt, n_p, d_in_p)   matmul dtype (bf16 or f32)
    y = y_ref[...]            # (bt, d_q_p)         matmul dtype
    mask_add = mask_ref[...]  # (bt, n_p)           f32 additive mask (precomputed, padded keys = -1e4)

    bt, n_p, d_p = x.shape

    # ---- residual pooling over the ORIGINAL sequence length (padded rows are zero) ----
    if pooling == "mean":
        residual = jnp.sum(x, axis=1, dtype=jnp.float32) * (1.0 / n_valid)   # (bt, d_p) f32
    else:
        xm = x
        if n_p != n_valid:
            seq_valid = jax.lax.broadcasted_iota(jnp.int32, (1, n_p, 1), 1) < n_valid
            xm = jnp.where(seq_valid, x, jnp.array(-jnp.inf, dtype=x.dtype))
        residual = jnp.max(xm, axis=1).astype(jnp.float32)

    # ---- shared-weight projections: one wide MXU matmul each, f32 accumulation ----
    x2 = x.reshape(bt * n_p, d_p)                                            # tile-aligned, no relayout
    q = jnp.dot(y, wq_ref[...], preferred_element_type=jnp.float32)          # (bt, dk_p)
    k = jnp.dot(x2, wk_ref[...], preferred_element_type=jnp.float32)         # (bt*n_p, dk_p)
    v = jnp.dot(x2, wv_ref[...], preferred_element_type=jnp.float32)         # (bt*n_p, dv_p)
    dk_p = q.shape[-1]
    dv_p = v.shape[-1]
    k3 = k.reshape(bt, n_p, dk_p)
    v3 = v.reshape(bt, n_p, dv_p)

    # ---- scores + numerically-stable softmax, all f32 (VPU + XLU + EUP) ----
    scores = jnp.sum(q[:, None, :] * k3, axis=-1) * norm_fact + mask_add     # (bt, n_p)
    m = jnp.max(scores, axis=-1, keepdims=True)
    e = jnp.exp(scores - m)
    probs = e * pl.reciprocal(jnp.sum(e, axis=-1, keepdims=True), approx=True)
    # TODO(synk): nn.Dropout(0.2) on the attention probs is identity in eval mode; not applied.

    # ---- attention-weighted value sum over the sequence axis ----
    att = jnp.sum(probs[:, :, None] * v3, axis=1)                            # (bt, dv_p) f32

    # ---- fc_v + residual + LayerNorm over the ORIGINAL dim_v width (padded columns are zero) ----
    z = (jnp.dot(att.astype(x.dtype), wfc_ref[...],
                 preferred_element_type=jnp.float32)
         + bfc_ref[...] + residual)                                          # (bt, d_p) f32
    inv_d = 1.0 / d_valid
    mu = jnp.sum(z, axis=-1, keepdims=True) * inv_d
    zc = z - mu
    if d_p != d_valid:
        col_valid = jax.lax.broadcasted_iota(jnp.int32, (1, d_p), 1) < d_valid
        zc = jnp.where(col_valid, zc, 0.0)
    var = jnp.sum(zc * zc, axis=-1, keepdims=True) * inv_d
    out_ref[...] = (zc * jax.lax.rsqrt(var + eps) * gamma_ref[...]
                    + beta_ref[...]).astype(out_ref.dtype)


def _vmem_caps():
    """(vmem_limit_bytes for the compiler, planning budget for tile selection)."""
    cap = 64 * 1024 * 1024                    # conservative default: v7x per-TensorCore VMEM
    try:
        info = pltpu.get_tpu_info()
        cap = int(getattr(info, "vmem_capacity_bytes", cap))
    except Exception:
        pass
    vmem_limit = min(int(cap * 0.85), 110 * 1024 * 1024)   # ~108 MiB on 128 MiB chips, ~54 MiB on v7x
    budget = int(vmem_limit * 0.8)                          # headroom for compiler scratch / regalloc
    return vmem_limit, budget


def _choose_batch_tile(B, n_p, d_in_p, d_q_p, d_k_p, d_v_p, x_bytes, budget):
    """VMEM-aware batch tile (multiple of 8 sublanes), >= 2 grid steps when B allows (v7x 2 TCs)."""
    # grid-invariant weights, charged as double-buffered (portable, no reliance on Buffered(1))
    weights = 2 * x_bytes * (d_q_p * d_k_p + d_in_p * d_k_p + d_in_p * d_v_p
                             + d_v_p * d_in_p) + 2 * 4 * 3 * d_in_p
    per_row = (2 * n_p * d_in_p * x_bytes      # x block, double-buffered (dominant HBM stream)
               + 2 * n_p * 4                   # additive mask, double-buffered
               + 2 * d_q_p * x_bytes           # y, double-buffered
               + 2 * d_in_p * 4                # out, double-buffered
               + 8 * n_p * (d_k_p + d_v_p)     # k/v f32 + scores/att broadcast temporaries
               + 8 * d_in_p * 4)               # residual / z / att / small temps
    avail = budget - weights
    bt = (avail // per_row) if avail > per_row * 8 else 8
    bt = int(max(8, min(bt, 256, B)))          # ~256 MXU rows/step is plenty; amortizes step overhead
    bt = max(8, (bt // 8) * 8)
    if B >= 16:                                # keep >= 2 grid steps so both v7x TensorCores get work
        bt = min(bt, _round_up(pl.cdiv(B, 2), 8))
    return bt


def previewing_aware_attention(mask, x, y, params, *, pooling="mean",
                               matmul_dtype=jnp.bfloat16):
    """Fused PaA forward. mask:(B,n) x:(B,n,dim_in) y:(B,1,dim_in_q) -> (B,dim_in)."""
    B, n, dim_in = x.shape
    _, m_q, dim_in_q = y.shape
    assert m_q == 1, "module squeezes a single query token"
    dim_k = params["wq"].shape[1]
    dim_v = params["wv"].shape[1]
    assert dim_v == dim_in, "LayerNorm(dim_v) over dim_in features requires dim_v == dim_in"

    f32 = jnp.float32
    x_bytes = jnp.dtype(matmul_dtype).itemsize

    # ---- padded geometry: sublane (8) on the sequence axis, lane (128) on feature axes ----
    n_p = _round_up(n, 8)
    d_in_p = _round_up(dim_in, 128)
    d_q_p = _round_up(dim_in_q, 128)
    d_k_p = _round_up(dim_k, 128)
    d_v_p = _round_up(dim_v, 128)
    assert d_v_p == d_in_p

    vmem_limit, budget = _vmem_caps()
    bt = _choose_batch_tile(B, n_p, d_in_p, d_q_p, d_k_p, d_v_p, x_bytes, budget)
    B_p = _round_up(B, bt)
    grid = (B_p // bt,)

    # ---- one-time casts + zero padding in the wrapper (NOT per grid step in the kernel) ----
    xp = jnp.zeros((B_p, n_p, d_in_p), matmul_dtype).at[:B, :n, :dim_in].set(
        x.astype(matmul_dtype))
    yp = jnp.zeros((B_p, d_q_p), matmul_dtype).at[:B, :dim_in_q].set(
        y.reshape(B, dim_in_q).astype(matmul_dtype))
    # additive attention mask; padded batch rows / key positions are fully masked (-1e4)
    mask_add = jnp.full((B_p, n_p), -10000.0, f32).at[:B, :n].set(
        (1.0 - mask.astype(f32)) * -10000.0)
    wq = jnp.zeros((d_q_p, d_k_p), matmul_dtype).at[:dim_in_q, :dim_k].set(
        params["wq"].astype(matmul_dtype))
    wk = jnp.zeros((d_in_p, d_k_p), matmul_dtype).at[:dim_in, :dim_k].set(
        params["wk"].astype(matmul_dtype))
    wv = jnp.zeros((d_in_p, d_v_p), matmul_dtype).at[:dim_in, :dim_v].set(
        params["wv"].astype(matmul_dtype))
    wfc = jnp.zeros((d_v_p, d_in_p), matmul_dtype).at[:dim_v, :dim_in].set(
        params["wfc"].astype(matmul_dtype))
    bfc = jnp.zeros((1, d_in_p), f32).at[0, :dim_in].set(params["bfc"].astype(f32))
    gamma = jnp.zeros((1, d_v_p), f32).at[0, :dim_v].set(params["gamma"].astype(f32))
    beta = jnp.zeros((1, d_v_p), f32).at[0, :dim_v].set(params["beta"].astype(f32))

    kernel = functools.partial(
        _paa_kernel,
        norm_fact=1.0 / math.sqrt(dim_k),
        pooling=pooling,
        eps=1e-6,
        n_valid=n,
        d_valid=dim_in,
    )

    # Advisory cost estimate so XLA schedules the wrapper-side pad/cast prep around the call.
    flops = (2 * B_p * n_p * d_in_p * (d_k_p + d_v_p)   # k/v projections
             + 2 * B_p * d_q_p * d_k_p                  # q projection
             + 2 * B_p * n_p * (d_k_p + d_v_p)          # scores + attention-weighted sum
             + 2 * B_p * d_v_p * d_in_p)                # fc_v
    bytes_accessed = (xp.size * x_bytes + yp.size * x_bytes + mask_add.size * 4
                      + (wq.size + wk.size + wv.size + wfc.size) * x_bytes
                      + (bfc.size + gamma.size + beta.size) * 4
                      + B_p * d_in_p * 4)
    cost = pl.CostEstimate(flops=int(flops), transcendentals=int(B_p * n_p),
                           bytes_accessed=int(bytes_accessed))

    out = pl.pallas_call(
        kernel,
        out_shape=jax.ShapeDtypeStruct((B_p, d_in_p), f32),
        grid=grid,
        in_specs=[
            pl.BlockSpec((bt, n_p), lambda b: (b, 0)),               # additive mask
            pl.BlockSpec((bt, n_p, d_in_p), lambda b: (b, 0, 0)),    # x (matmul dtype)
            pl.BlockSpec((bt, d_q_p), lambda b: (b, 0)),             # y (query, matmul dtype)
            pl.BlockSpec((d_q_p, d_k_p), lambda b: (0, 0)),          # W_q
            pl.BlockSpec((d_in_p, d_k_p), lambda b: (0, 0)),         # W_k
            pl.BlockSpec((d_in_p, d_v_p), lambda b: (0, 0)),         # W_v
            pl.BlockSpec((d_v_p, d_in_p), lambda b: (0, 0)),         # W_fc
            pl.BlockSpec((1, d_in_p), lambda b: (0, 0)),             # b_fc
            pl.BlockSpec((1, d_v_p), lambda b: (0, 0)),              # ln gamma
            pl.BlockSpec((1, d_v_p), lambda b: (0, 0)),              # ln beta
        ],
        out_specs=pl.BlockSpec((bt, d_in_p), lambda b: (b, 0)),      # lane-dense slab
        compiler_params=pltpu.CompilerParams(
            dimension_semantics=("parallel",),
            vmem_limit_bytes=vmem_limit),
        cost_estimate=cost,
    )(mask_add, xp, yp, wq, wk, wv, wfc, bfc, gamma, beta)

    return out[:B, :dim_in]


def _reference(mask, x, y, params, pooling="mean"):
    """Pure-JAX reference mirroring the PyTorch forward (eval mode)."""
    dim_k = params["wq"].shape[1]
    if pooling == "mean":
        residual = jnp.mean(x, axis=1)
    else:
        residual = jnp.max(x, axis=1)
    q = jnp.einsum("bmd,dk->bmk", y, params["wq"])
    k = jnp.einsum("bnd,dk->bnk", x, params["wk"])
    v = jnp.einsum("bnd,dv->bnv", x, params["wv"])
    att_mask = (1.0 - mask[:, None, :]) * -10000.0
    dist = jnp.einsum("bmk,bnk->bmn", q, k) / math.sqrt(dim_k)
    probs = jax.nn.softmax(dist + att_mask, axis=-1)
    att = jnp.einsum("bmn,bnv->bmv", probs, v)[:, 0, :]
    z = att @ params["wfc"] + params["bfc"] + residual
    mu = jnp.mean(z, axis=-1, keepdims=True)
    var = jnp.mean((z - mu) ** 2, axis=-1, keepdims=True)
    return (z - mu) / jnp.sqrt(var + 1e-6) * params["gamma"] + params["beta"]


if __name__ == "__main__":
    key = jax.random.PRNGKey(0)

    def make_case(k, B, n, dim_in_q, dim_in, dim_k, dim_v):
        k_x, k_y, k_wq, k_wk, k_wv, k_wfc, k_bfc, k_len = jax.random.split(k, 8)
        x = jax.random.normal(k_x, (B, n, dim_in), dtype=jnp.float32)
        y = jax.random.normal(k_y, (B, 1, dim_in_q), dtype=jnp.float32)
        lengths = jax.random.randint(k_len, (B,), 1, n + 1).astype(jnp.int32)
        mask = (jnp.arange(n)[None, :] < lengths[:, None]).astype(jnp.float32)
        params = {
            "wq": jax.random.normal(k_wq, (dim_in_q, dim_k), jnp.float32) * 0.1,
            "wk": jax.random.normal(k_wk, (dim_in, dim_k), jnp.float32) * 0.1,
            "wv": jax.random.normal(k_wv, (dim_in, dim_v), jnp.float32) * 0.1,
            "wfc": jax.random.normal(k_wfc, (dim_v, dim_in), jnp.float32) * 0.1,
            "bfc": jax.random.normal(k_bfc, (dim_in,), jnp.float32) * 0.1,
            "gamma": jnp.ones((dim_v,), jnp.float32),
            "beta": jnp.zeros((dim_v,), jnp.float32),
        }
        return mask, x, y, params

    k1, k2 = jax.random.split(key)

    # Case A: small shapes, mean pooling.  bf16 MXU operands (default) + f32 operands.
    mask, x, y, params = make_case(k1, B=8, n=8, dim_in_q=32, dim_in=32, dim_k=32, dim_v=32)
    ref = _reference(mask, x, y, params, pooling="mean")

    out_bf16 = jax.block_until_ready(
        previewing_aware_attention(mask, x, y, params, pooling="mean",
                                   matmul_dtype=jnp.bfloat16))
    assert out_bf16.shape == ref.shape
    # bf16 operands (f32 accumulation) vs f32 reference -> looser tolerance.
    assert jnp.allclose(out_bf16, ref, atol=5e-2, rtol=5e-2), \
        float(jnp.max(jnp.abs(out_bf16 - ref)))

    out_f32 = jax.block_until_ready(
        previewing_aware_attention(mask, x, y, params, pooling="mean",
                                   matmul_dtype=jnp.float32))
    assert jnp.allclose(out_f32, ref, atol=5e-3, rtol=5e-3), \
        float(jnp.max(jnp.abs(out_f32 - ref)))

    # Case B: unaligned shapes (n=10, feature dims not multiples of 128), max pooling,
    # multiple batch tiles (B=24 -> grid of >=2 steps), f32 operands.
    mask, x, y, params = make_case(k2, B=24, n=10, dim_in_q=40, dim_in=48, dim_k=24, dim_v=48)
    ref = _reference(mask, x, y, params, pooling="max")
    out = jax.block_until_ready(
        previewing_aware_attention(mask, x, y, params, pooling="max",
                                   matmul_dtype=jnp.float32))
    assert out.shape == ref.shape
    assert jnp.allclose(out, ref, atol=5e-3, rtol=5e-3), \
        float(jnp.max(jnp.abs(out - ref)))

    print("KERNEL_OK")
</pallas_src>

<mosaic_0001>
module attributes {stable_mosaic.version = 11 : i64} {
  func.func @_paa_kernel(%arg0: i32, %arg1: memref<8x8xf32, #tpu.memory_space<vmem>>, %arg2: memref<8x8x128xbf16, #tpu.memory_space<vmem>>, %arg3: memref<8x128xbf16, #tpu.memory_space<vmem>>, %arg4: memref<128x128xbf16, #tpu.memory_space<vmem>>, %arg5: memref<128x128xbf16, #tpu.memory_space<vmem>>, %arg6: memref<128x128xbf16, #tpu.memory_space<vmem>>, %arg7: memref<128x128xbf16, #tpu.memory_space<vmem>>, %arg8: memref<1x128xf32, #tpu.memory_space<vmem>>, %arg9: memref<1x128xf32, #tpu.memory_space<vmem>>, %arg10: memref<1x128xf32, #tpu.memory_space<vmem>>, %arg11: memref<8x128xf32, #tpu.memory_space<vmem>>) attributes {dimension_semantics = [#tpu.dimension_semantics<parallel>], iteration_bounds = array<i64: 1>, scalar_prefetch = 0 : i64, scratch_operands = 0 : i64, tpu.core_type = #tpu.core_type<tc>, window_params = [{transform_indices = @transform_0, window_bounds = array<i64: 8, 8>}, {transform_indices = @transform_1, window_bounds = array<i64: 8, 8, 128>}, {transform_indices = @transform_2, window_bounds = array<i64: 8, 128>}, {pipeline_mode = #tpu.pipeline_mode<synchronous>, transform_indices = @transform_3, window_bounds = array<i64: 128, 128>}, {pipeline_mode = #tpu.pipeline_mode<synchronous>, transform_indices = @transform_4, window_bounds = array<i64: 128, 128>}, {pipeline_mode = #tpu.pipeline_mode<synchronous>, transform_indices = @transform_5, window_bounds = array<i64: 128, 128>}, {pipeline_mode = #tpu.pipeline_mode<synchronous>, transform_indices = @transform_6, window_bounds = array<i64: 128, 128>}, {pipeline_mode = #tpu.pipeline_mode<synchronous>, transform_indices = @transform_7, window_bounds = array<i64: 1, 128>}, {pipeline_mode = #tpu.pipeline_mode<synchronous>, transform_indices = @transform_8, window_bounds = array<i64: 1, 128>}, {pipeline_mode = #tpu.pipeline_mode<synchronous>, transform_indices = @transform_9, window_bounds = array<i64: 1, 128>}, {transform_indices = @transform_10, window_bounds = array<i64: 8, 128>}]} {
    %c0 = arith.constant 0 : index
    %c0_0 = arith.constant 0 : index
    %c0_1 = arith.constant 0 : index
    %0 = vector.load %arg2[%c0, %c0_0, %c0_1] : memref<8x8x128xbf16, #tpu.memory_space<vmem>>, vector<8x8x128xbf16>
    %c0_2 = arith.constant 0 : index
    %c0_3 = arith.constant 0 : index
    %1 = vector.load %arg3[%c0_2, %c0_3] : memref<8x128xbf16, #tpu.memory_space<vmem>>, vector<8x128xbf16>
    %c0_4 = arith.constant 0 : index
    %c0_5 = arith.constant 0 : index
    %2 = vector.load %arg1[%c0_4, %c0_5] : memref<8x8xf32, #tpu.memory_space<vmem>>, vector<8x8xf32>
    %3 = arith.extf %0 : vector<8x8x128xbf16> to vector<8x8x128xf32>
    %cst = arith.constant dense<0.000000e+00> : vector<8x128xf32>
    %4 = vector.multi_reduction <add>, %3, %cst [1] : vector<8x8x128xf32> to vector<8x128xf32>
    %cst_6 = arith.constant 1.250000e-01 : f32
    %5 = vector.broadcast %cst_6 : f32 to vector<8x128xf32>
    %6 = arith.mulf %4, %5 : vector<8x128xf32>
    %7 = vector.shape_cast %0 : vector<8x8x128xbf16> to vector<64x128xbf16>
    %c0_7 = arith.constant 0 : index
    %c0_8 = arith.constant 0 : index
    %8 = vector.load %arg4[%c0_7, %c0_8] : memref<128x128xbf16, #tpu.memory_space<vmem>>, vector<128x128xbf16>
    %cst_9 = arith.constant dense<0.000000e+00> : vector<8x128xf32>
    %9 = tpu.matmul %1, %8, %cst_9 {dimension_numbers = #tpu.dot_dimension_numbers<[1], [0], [0], [1], [0, 0, 1, 1], [], []>} : vector<8x128xbf16>, vector<128x128xbf16>, vector<8x128xf32> -> vector<8x128xf32>
    %c0_10 = arith.constant 0 : index
    %c0_11 = arith.constant 0 : index
    %10 = vector.load %arg5[%c0_10, %c0_11] : memref<128x128xbf16, #tpu.memory_space<vmem>>, vector<128x128xbf16>
    %cst_12 = arith.constant dense<0.000000e+00> : vector<64x128xf32>
    %11 = tpu.matmul %7, %10, %cst_12 {dimension_numbers = #tpu.dot_dimension_numbers<[1], [0], [0], [1], [0, 0, 1, 1], [], []>} : vector<64x128xbf16>, vector<128x128xbf16>, vector<64x128xf32> -> vector<64x128xf32>
    %c0_13 = arith.constant 0 : index
    %c0_14 = arith.constant 0 : index
    %12 = vector.load %arg6[%c0_13, %c0_14] : memref<128x128xbf16, #tpu.memory_space<vmem>>, vector<128x128xbf16>
    %cst_15 = arith.constant dense<0.000000e+00> : vector<64x128xf32>
    %13 = tpu.matmul %7, %12, %cst_15 {dimension_numbers = #tpu.dot_dimension_numbers<[1], [0], [0], [1], [0, 0, 1, 1], [], []>} : vector<64x128xbf16>, vector<128x128xbf16>, vector<64x128xf32> -> vector<64x128xf32>
    %14 = vector.shape_cast %11 : vector<64x128xf32> to vector<8x8x128xf32>
    %15 = vector.shape_cast %13 : vector<64x128xf32> to vector<8x8x128xf32>
    %16 = vector.shape_cast %9 : vector<8x128xf32> to vector<8x1x128xf32>
    %17 = vector.broadcast %16 : vector<8x1x128xf32> to vector<8x8x128xf32>
    %18 = arith.mulf %17, %14 : vector<8x8x128xf32>
    %cst_16 = arith.constant dense<0.000000e+00> : vector<8x8xf32>
    %19 = vector.multi_reduction <add>, %18, %cst_16 [2] : vector<8x8x128xf32> to vector<8x8xf32>
    %cst_17 = arith.constant 0.176776692 : f32
    %20 = vector.broadcast %cst_17 : f32 to vector<8x8xf32>
    %21 = arith.mulf %19, %20 : vector<8x8xf32>
    %22 = arith.addf %21, %2 : vector<8x8xf32>
    %cst_18 = arith.constant dense<0xFF800000> : vector<8xf32>
    %23 = vector.multi_reduction <maximumf>, %22, %cst_18 [1] : vector<8x8xf32> to vector<8xf32>
    %24 = vector.shape_cast %23 : vector<8xf32> to vector<8x1xf32>
    %25 = vector.broadcast %24 : vector<8x1xf32> to vector<8x8xf32>
    %26 = arith.subf %22, %25 : vector<8x8xf32>
    %27 = math.exp %26 : vector<8x8xf32>
    %cst_19 = arith.constant dense<0.000000e+00> : vector<8xf32>
    %28 = vector.multi_reduction <add>, %27, %cst_19 [1] : vector<8x8xf32> to vector<8xf32>
    %29 = vector.shape_cast %28 : vector<8xf32> to vector<8x1xf32>
    %30 = tpu.reciprocal %29 {approx = true} : vector<8x1xf32> -> vector<8x1xf32>
    %31 = vector.broadcast %30 : vector<8x1xf32> to vector<8x8xf32>
    %32 = arith.mulf %27, %31 : vector<8x8xf32>
    %33 = vector.shape_cast %32 : vector<8x8xf32> to vector<8x8x1xf32>
    %34 = vector.broadcast %33 : vector<8x8x1xf32> to vector<8x8x128xf32>
    %35 = arith.mulf %34, %15 : vector<8x8x128xf32>
    %cst_20 = arith.constant dense<0.000000e+00> : vector<8x128xf32>
    %36 = vector.multi_reduction <add>, %35, %cst_20 [1] : vector<8x8x128xf32> to vector<8x128xf32>
    %37 = arith.truncf %36 : vector<8x128xf32> to vector<8x128xbf16>
    %c0_21 = arith.constant 0 : index
    %c0_22 = arith.constant 0 : index
    %38 = vector.load %arg7[%c0_21, %c0_22] : memref<128x128xbf16, #tpu.memory_space<vmem>>, vector<128x128xbf16>
    %cst_23 = arith.constant dense<0.000000e+00> : vector<8x128xf32>
    %39 = tpu.matmul %37, %38, %cst_23 {dimension_numbers = #tpu.dot_dimension_numbers<[1], [0], [0], [1], [0, 0, 1, 1], [], []>} : vector<8x128xbf16>, vector<128x128xbf16>, vector<8x128xf32> -> vector<8x128xf32>
    %c0_24 = arith.constant 0 : index
    %c0_25 = arith.constant 0 : index
    %40 = vector.load %arg8[%c0_24, %c0_25] : memref<1x128xf32, #tpu.memory_space<vmem>>, vector<1x128xf32>
    %41 = vector.broadcast %40 : vector<1x128xf32> to vector<8x128xf32>
    %42 = arith.addf %39, %41 : vector<8x128xf32>
    %43 = arith.addf %42, %6 : vector<8x128xf32>
    %cst_26 = arith.constant dense<0.000000e+00> : vector<8xf32>
    %44 = vector.multi_reduction <add>, %43, %cst_26 [1] : vector<8x128xf32> to vector<8xf32>
    %45 = vector.shape_cast %44 : vector<8xf32> to vector<8x1xf32>
    %cst_27 = arith.constant 3.125000e-02 : f32
    %46 = vector.broadcast %cst_27 : f32 to vector<8x1xf32>
    %47 = arith.mulf %45, %46 : vector<8x1xf32>
    %48 = vector.broadcast %47 : vector<8x1xf32> to vector<8x128xf32>
    %49 = arith.subf %43, %48 : vector<8x128xf32>
    %50 = tpu.iota {dimensions = array<i32: 1>} : vector<1x128xi32>
    %c32_i32 = arith.constant 32 : i32
    %51 = vector.broadcast %c32_i32 : i32 to vector<1x128xi32>
    %52 = arith.cmpi slt, %50, %51 : vector<1x128xi32>
    %cst_28 = arith.constant 0.000000e+00 : f32
    %53 = vector.shape_cast %52 : vector<1x128xi1> to vector<1x128xi1>
    %54 = vector.broadcast %53 : vector<1x128xi1> to vector<8x128xi1>
    %55 = vector.broadcast %cst_28 : f32 to vector<8x128xf32>
    %56 = arith.select %54, %49, %55 : vector<8x128xi1>, vector<8x128xf32>
    %57 = arith.mulf %56, %56 : vector<8x128xf32>
    %cst_29 = arith.constant dense<0.000000e+00> : vector<8xf32>
    %58 = vector.multi_reduction <add>, %57, %cst_29 [1] : vector<8x128xf32> to vector<8xf32>
    %59 = vector.shape_cast %58 : vector<8xf32> to vector<8x1xf32>
    %cst_30 = arith.constant 3.125000e-02 : f32
    %60 = vector.broadcast %cst_30 : f32 to vector<8x1xf32>
    %61 = arith.mulf %59, %60 : vector<8x1xf32>
    %cst_31 = arith.constant 9.99999997E-7 : f32
    %62 = vector.broadcast %cst_31 : f32 to vector<8x1xf32>
    %63 = arith.addf %61, %62 : vector<8x1xf32>
    %64 = math.rsqrt %63 : vector<8x1xf32>
    %65 = vector.broadcast %64 : vector<8x1xf32> to vector<8x128xf32>
    %66 = arith.mulf %56, %65 : vector<8x128xf32>
    %c0_32 = arith.constant 0 : index
    %c0_33 = arith.constant 0 : index
    %67 = vector.load %arg9[%c0_32, %c0_33] : memref<1x128xf32, #tpu.memory_space<vmem>>, vector<1x128xf32>
    %68 = vector.broadcast %67 : vector<1x128xf32> to vector<8x128xf32>
    %69 = arith.mulf %66, %68 : vector<8x128xf32>
    %c0_34 = arith.constant 0 : index
    %c0_35 = arith.constant 0 : index
    %70 = vector.load %arg10[%c0_34, %c0_35] : memref<1x128xf32, #tpu.memory_space<vmem>>, vector<1x128xf32>
    %71 = vector.broadcast %70 : vector<1x128xf32> to vector<8x128xf32>
    %72 = arith.addf %69, %71 : vector<8x128xf32>
    %c0_36 = arith.constant 0 : index
    %c0_37 = arith.constant 0 : index
    %73 = vector.load %arg11[%c0_36, %c0_37] : memref<8x128xf32, #tpu.memory_space<vmem>>, vector<8x128xf32>
    tpu.vector_store %arg11[%c0_36, %c0_37], %72 {strides = array<i32>} : memref<8x128xf32, #tpu.memory_space<vmem>>, vector<8x128xf32>,
    return
  }
  func.func @transform_0(%arg0: i32) -> (i32, i32) {
    %c0_i32 = arith.constant 0 : i32
    %c0_i32_0 = arith.constant 0 : i32
    return %arg0, %c0_i32 : i32, i32
  }
  func.func @transform_1(%arg0: i32) -> (i32, i32, i32) {
    %c0_i32 = arith.constant 0 : i32
    %c0_i32_0 = arith.constant 0 : i32
    %c0_i32_1 = arith.constant 0 : i32
    return %arg0, %c0_i32, %c0_i32_0 : i32, i32, i32
  }
  func.func @transform_2(%arg0: i32) -> (i32, i32) {
    %c0_i32 = arith.constant 0 : i32
    %c0_i32_0 = arith.constant 0 : i32
    return %arg0, %c0_i32 : i32, i32
  }
  func.func @transform_3(%arg0: i32) -> (i32, i32) {
    %c0_i32 = arith.constant 0 : i32
    %c0_i32_0 = arith.constant 0 : i32
    %c0_i32_1 = arith.constant 0 : i32
    return %c0_i32, %c0_i32_0 : i32, i32
  }
  func.func @transform_4(%arg0: i32) -> (i32, i32) {
    %c0_i32 = arith.constant 0 : i32
    %c0_i32_0 = arith.constant 0 : i32
    %c0_i32_1 = arith.constant 0 : i32
    return %c0_i32, %c0_i32_0 : i32, i32
  }
  func.func @transform_5(%arg0: i32) -> (i32, i32) {
    %c0_i32 = arith.constant 0 : i32
    %c0_i32_0 = arith.constant 0 : i32
    %c0_i32_1 = arith.constant 0 : i32
    return %c0_i32, %c0_i32_0 : i32, i32
  }
  func.func @transform_6(%arg0: i32) -> (i32, i32) {
    %c0_i32 = arith.constant 0 : i32
    %c0_i32_0 = arith.constant 0 : i32
    %c0_i32_1 = arith.constant 0 : i32
    return %c0_i32, %c0_i32_0 : i32, i32
  }
  func.func @transform_7(%arg0: i32) -> (i32, i32) {
    %c0_i32 = arith.constant 0 : i32
    %c0_i32_0 = arith.constant 0 : i32
    %c0_i32_1 = arith.constant 0 : i32
    return %c0_i32, %c0_i32_0 : i32, i32
  }
  func.func @transform_8(%arg0: i32) -> (i32, i32) {
    %c0_i32 = arith.constant 0 : i32
    %c0_i32_0 = arith.constant 0 : i32
    %c0_i32_1 = arith.constant 0 : i32
    return %c0_i32, %c0_i32_0 : i32, i32
  }
  func.func @transform_9(%arg0: i32) -> (i32, i32) {
    %c0_i32 = arith.constant 0 : i32
    %c0_i32_0 = arith.constant 0 : i32
    %c0_i32_1 = arith.constant 0 : i32
    return %c0_i32, %c0_i32_0 : i32, i32
  }
  func.func @transform_10(%arg0: i32) -> (i32, i32) {
    %c0_i32 = arith.constant 0 : i32
    %c0_i32_0 = arith.constant 0 : i32
    return %arg0, %c0_i32 : i32, i32
  }
}

</mosaic_0001>

<llo_original>
// kernel: tpu_custom_call.1
$region0: #{tpu_custom_call.1}
  #allocation0 [shape = 'u32[]', space=smem, size = 0x4, offset = 0x4, fixed_abs, tag = 'smem constant byte address 0x4 - core index']
  #allocation1 [shape = 'u32[72,128]{1,0:T(1,128)}', space=vmem, size = 0x9000, scoped, tag = 'internal scratch']
  %s0 = inlined_call_operand.hbm [shape: f32[8,8], index: 0, kind: input, shape index: {}]
  %s1 = inlined_call_operand.hbm [shape: bf16[8,8,128], index: 1, kind: input, shape index: {}]
  %s2 = inlined_call_operand.hbm [shape: bf16[8,128], index: 2, kind: input, shape index: {}]
  %s3 = inlined_call_operand.hbm [shape: bf16[128,128], index: 3, kind: input, shape index: {}]
  %s4 = inlined_call_operand.hbm [shape: bf16[128,128], index: 4, kind: input, shape index: {}]
  %s5 = inlined_call_operand.hbm [shape: bf16[128,128], index: 5, kind: input, shape index: {}]
  %s6 = inlined_call_operand.hbm [shape: bf16[128,128], index: 6, kind: input, shape index: {}]
  %s7 = inlined_call_operand.vmem [shape: f32[1,128], index: 7, kind: input, shape index: {}]
  %s8 = inlined_call_operand.vmem [shape: f32[1,128], index: 8, kind: input, shape index: {}]
  %s9 = inlined_call_operand.vmem [shape: f32[1,128], index: 9, kind: input, shape index: {}]
  %s10 = inlined_call_operand.hbm [shape: f32[8,128], index: 10, kind: output, shape index: {}]
  %s11 = sld [smem:[#allocation0]]
  $region78: #{tpu_custom_call.1} parent=0
    _
  %s13 = ssub.s32 1, %s11
  %s14 = scalar_select 0, %s13, %s11
  $region1: #{tpu_custom_call.1} parent=0
    #allocation2 [shape = 'u8[4096]{0}', space=vmem, size = 0x1000, scoped, tag = 'input window, operand 0, single buffered']
    #allocation3 [shape = 's32[1]{0}', space=sflag, size = 0x4, scoped, tag = 'scoped memory for tpu_custom_call.1']
    #allocation4 [shape = 's32[1]{0}', space=sflag, size = 0x4, scoped, tag = 'scoped memory for tpu_custom_call.1']
    #allocation5 [shape = 'u8[16384]{0}', space=vmem, size = 0x4000, scoped, tag = 'input window, operand 1, single buffered']
    #allocation6 [shape = 's32[1]{0}', space=sflag, size = 0x4, scoped, tag = 'scoped memory for tpu_custom_call.1']
    #allocation7 [shape = 'u8[2048]{0}', space=vmem, size = 0x800, scoped, tag = 'input window, operand 2, single buffered']
    #allocation8 [shape = 'u8[32768]{0}', space=vmem, size = 0x8000, scoped, tag = 'input window, operand 3, single buffered']
    #allocation9 [shape = 's32[1]{0}', space=sflag, size = 0x4, scoped, tag = 'scoped memory for tpu_custom_call.1']
    #allocation10 [shape = 'u8[32768]{0}', space=vmem, size = 0x8000, scoped, tag = 'input window, operand 4, single buffered']
    #allocation11 [shape = 'u8[32768]{0}', space=vmem, size = 0x8000, scoped, tag = 'input window, operand 5, single buffered']
    #allocation12 [shape = 's32[1]{0}', space=sflag, size = 0x4, scoped, tag = 'scoped memory for tpu_custom_call.1']
    #allocation13 [shape = 'u8[32768]{0}', space=vmem, size = 0x8000, scoped, tag = 'input window, operand 6, single buffered']
    #allocation14 [shape = 'u8[4096]{0}', space=vmem, size = 0x1000, scoped, tag = 'output window, operand 0, single buffered']
    %15 = vsyncpa [#allocation3], 0
    %16 = vsyncpa [#allocation6], 0
    %17 = vsyncpa [#allocation9], 0
    %18 = vsyncpa [#allocation12], 0
    %19 = vsyncpa [#allocation4], 0
    // Predicated region
    $region2: #{tpu_custom_call.1} parent=1 // pred_check
      _
    $region3: #{tpu_custom_call.1} parent=1 // pred_check_branch
      %21 = sbr.rel (0) target = $region5
    $region4: #{tpu_custom_call.1} parent=1 // pred_region
      %23 = vsyncadd [#allocation3], 0
      %s25 = sshll.u32 %s0, 4
      %s26 = int_to_ptr.hbm [resolvable:$true] %s25
      %s27 = sshll.u32 [#allocation2], 4
      %s28 = int_to_ptr.vmem [resolvable:$true] %s27
      %30 = dma.hbm_to_vmem [thread:$0]  %s26, 128, %s28, [#allocation3]
    $region5: #{tpu_custom_call.1} parent=1 // pred_fallthru
      _
    // Predicated region
    $region6: #{tpu_custom_call.1} parent=1 // pred_check
      _
    $region7: #{tpu_custom_call.1} parent=1 // pred_check_branch
      %32 = sbr.rel (0) target = $region9
    $region8: #{tpu_custom_call.1} parent=1 // pred_region
      %34 = vsyncadd [#allocation6], 0
      %s35 = sshll.u32 %s1, 4
      %s36 = int_to_ptr.hbm [resolvable:$true] %s35
      %s37 = sshll.u32 [#allocation5], 4
      %s38 = int_to_ptr.vmem [resolvable:$true] %s37
      %43 = dma.hbm_to_vmem [thread:$0]  %s36, 512, %s38, [#allocation6], 64, 64, 4
    $region9: #{tpu_custom_call.1} parent=1 // pred_fallthru
      _
    // Predicated region
    $region10: #{tpu_custom_call.1} parent=1 // pred_check
      _
    $region11: #{tpu_custom_call.1} parent=1 // pred_check_branch
      %45 = sbr.rel (0) target = $region13
    $region12: #{tpu_custom_call.1} parent=1 // pred_region
      %47 = vsyncadd [#allocation6], 0
      %s49 = sshll.u32 %s2, 4
      %s50 = int_to_ptr.hbm [resolvable:$true] %s49
      %s51 = sshll.u32 [#allocation7], 4
      %s52 = int_to_ptr.vmem [resolvable:$true] %s51
      %54 = dma.hbm_to_vmem [thread:$0]  %s50, 64, %s52, [#allocation6]
    $region13: #{tpu_custom_call.1} parent=1 // pred_fallthru
      _
    // Predicated region
    $region14: #{tpu_custom_call.1} parent=1 // pred_check
      _
    $region15: #{tpu_custom_call.1} parent=1 // pred_check_branch
      %56 = sbr.rel (0) target = $region17
    $region16: #{tpu_custom_call.1} parent=1 // pred_region
      %58 = vsyncadd [#allocation9], 0
      %s59 = sshll.u32 %s3, 4
      %s60 = int_to_ptr.hbm [resolvable:$true] %s59
      %s61 = sshll.u32 [#allocation8], 4
      %s62 = int_to_ptr.vmem [resolvable:$true] %s61
      %67 = dma.hbm_to_vmem [thread:$0]  %s60, 1024, %s62, [#allocation9], 64, 64, 4
    $region17: #{tpu_custom_call.1} parent=1 // pred_fallthru
      _
    // Predicated region
    $region18: #{tpu_custom_call.1} parent=1 // pred_check
      _
    $region19: #{tpu_custom_call.1} parent=1 // pred_check_branch
      %69 = sbr.rel (0) target = $region21
    $region20: #{tpu_custom_call.1} parent=1 // pred_region
      %71 = vsyncadd [#allocation9], 0
      %s72 = sshll.u32 %s4, 4
      %s73 = int_to_ptr.hbm [resolvable:$true] %s72
      %s74 = sshll.u32 [#allocation10], 4
      %s75 = int_to_ptr.vmem [resolvable:$true] %s74
      %80 = dma.hbm_to_vmem [thread:$0]  %s73, 1024, %s75, [#allocation9], 64, 64, 4
    $region21: #{tpu_custom_call.1} parent=1 // pred_fallthru
      _
    // Predicated region
    $region22: #{tpu_custom_call.1} parent=1 // pred_check
      _
    $region23: #{tpu_custom_call.1} parent=1 // pred_check_branch
      %82 = sbr.rel (0) target = $region25
    $region24: #{tpu_custom_call.1} parent=1 // pred_region
      %84 = vsyncadd [#allocation12], 0
      %s85 = sshll.u32 %s5, 4
      %s86 = int_to_ptr.hbm [resolvable:$true] %s85
      %s87 = sshll.u32 [#allocation11], 4
      %s88 = int_to_ptr.vmem [resolvable:$true] %s87
      %93 = dma.hbm_to_vmem [thread:$0]  %s86, 1024, %s88, [#allocation12], 64, 64, 4
    $region25: #{tpu_custom_call.1} parent=1 // pred_fallthru
      _
    // Predicated region
    $region26: #{tpu_custom_call.1} parent=1 // pred_check
      _
    $region27: #{tpu_custom_call.1} parent=1 // pred_check_branch
      %95 = sbr.rel (0) target = $region29
    $region28: #{tpu_custom_call.1} parent=1 // pred_region
      %97 = vsyncadd [#allocation12], 0
      %s98 = sshll.u32 %s6, 4
      %s99 = int_to_ptr.hbm [resolvable:$true] %s98
      %s100 = sshll.u32 [#allocation13], 4
      %s101 = int_to_ptr.vmem [resolvable:$true] %s100
      %106 = dma.hbm_to_vmem [thread:$0]  %s99, 1024, %s101, [#allocation12], 64, 64, 4
    $region29: #{tpu_custom_call.1} parent=1 // pred_fallthru
      _
    // Predicated region
    $region30: #{tpu_custom_call.1} parent=1 // pred_check
      _
    $region31: #{tpu_custom_call.1} parent=1 // pred_check_branch
      %108 = sbr.rel (0) target = $region33
    $region32: #{tpu_custom_call.1} parent=1 // pred_region
      _
    $region33: #{tpu_custom_call.1} parent=1 // pred_fallthru
      _
    // Predicated region
    $region34: #{tpu_custom_call.1} parent=1 // pred_check
      _
    $region35: #{tpu_custom_call.1} parent=1 // pred_check_branch
      %110 = sbr.rel (0) target = $region37
    $region36: #{tpu_custom_call.1} parent=1 // pred_region
      _
    $region37: #{tpu_custom_call.1} parent=1 // pred_fallthru
      _
    // Predicated region
    $region38: #{tpu_custom_call.1} parent=1 // pred_check
      _
    $region39: #{tpu_custom_call.1} parent=1 // pred_check_branch
      %112 = sbr.rel (0) target = $region41
    $region40: #{tpu_custom_call.1} parent=1 // pred_region
      _
    $region41: #{tpu_custom_call.1} parent=1 // pred_fallthru
      _
    // Predicated region
    $region42: #{tpu_custom_call.1} parent=1 // pred_check
      _
    $region43: #{tpu_custom_call.1} parent=1 // pred_check_branch
      %114 = sbr.rel (0) target = $region45
    $region44: #{tpu_custom_call.1} parent=1 // pred_region
      %116 = dma.done [#allocation3], 128
    $region45: #{tpu_custom_call.1} parent=1 // pred_fallthru
      _
    // Predicated region
    $region46: #{tpu_custom_call.1} parent=1 // pred_check
      _
    $region47: #{tpu_custom_call.1} parent=1 // pred_check_branch
      %118 = sbr.rel (0) target = $region49
    $region48: #{tpu_custom_call.1} parent=1 // pred_region
      %120 = dma.done [#allocation6], 512
    $region49: #{tpu_custom_call.1} parent=1 // pred_fallthru
      _
    // Predicated region
    $region50: #{tpu_custom_call.1} parent=1 // pred_check
      _
    $region51: #{tpu_custom_call.1} parent=1 // pred_check_branch
      %122 = sbr.rel (0) target = $region53
    $region52: #{tpu_custom_call.1} parent=1 // pred_region
      %124 = dma.done [#allocation6], 64
    $region53: #{tpu_custom_call.1} parent=1 // pred_fallthru
      _
    // Predicated region
    $region54: #{tpu_custom_call.1} parent=1 // pred_check
      _
    $region55: #{tpu_custom_call.1} parent=1 // pred_check_branch
      %126 = sbr.rel (0) target = $region57
    $region56: #{tpu_custom_call.1} parent=1 // pred_region
      %128 = dma.done [#allocation9], 1024
    $region57: #{tpu_custom_call.1} parent=1 // pred_fallthru
      _
    // Predicated region
    $region58: #{tpu_custom_call.1} parent=1 // pred_check
      _
    $region59: #{tpu_custom_call.1} parent=1 // pred_check_branch
      %130 = sbr.rel (0) target = $region61
    $region60: #{tpu_custom_call.1} parent=1 // pred_region
      %132 = dma.done [#allocation9], 1024
    $region61: #{tpu_custom_call.1} parent=1 // pred_fallthru
      _
    // Predicated region
    $region62: #{tpu_custom_call.1} parent=1 // pred_check
      _
    $region63: #{tpu_custom_call.1} parent=1 // pred_check_branch
      %134 = sbr.rel (0) target = $region65
    $region64: #{tpu_custom_call.1} parent=1 // pred_region
      %136 = dma.done [#allocation12], 1024
    $region65: #{tpu_custom_call.1} parent=1 // pred_fallthru
      _
    // Predicated region
    $region66: #{tpu_custom_call.1} parent=1 // pred_check
      _
    $region67: #{tpu_custom_call.1} parent=1 // pred_check_branch
      %138 = sbr.rel (0) target = $region69
    $region68: #{tpu_custom_call.1} parent=1 // pred_region
      %140 = dma.done [#allocation12], 1024
    $region69: #{tpu_custom_call.1} parent=1 // pred_fallthru
      _
    %v141 = vld [vmem:[#allocation5] sm:$0xf]
    %v142 = vld [vmem:[#allocation5 + $0x4] sm:$0xf]
    %v143 = vld [vmem:[#allocation5 + $0x8] sm:$0xf]
    %v144 = vld [vmem:[#allocation5 + $0xc] sm:$0xf]
    %v145 = vld [vmem:[#allocation5 + $0x10] sm:$0xf]
    %v146 = vld [vmem:[#allocation5 + $0x14] sm:$0xf]
    %v147 = vld [vmem:[#allocation5 + $0x18] sm:$0xf]
    %v148 = vld [vmem:[#allocation5 + $0x1c] sm:$0xf]
    %v149 = vld [vmem:[#allocation7] sm:$0xf]
    %v150 = vld [vmem:[#allocation2] sm:$0xff]
    %v151 = vunpack.c.l.bf16 %v141
    %v152 = vunpack.c.l.bf16 %v142
    %v153 = vunpack.c.l.bf16 %v143
    %v154 = vunpack.c.l.bf16 %v144
    %v155 = vunpack.c.l.bf16 %v145
    %v156 = vunpack.c.l.bf16 %v146
    %v157 = vunpack.c.l.bf16 %v147
    %v158 = vunpack.c.l.bf16 %v148
    %v159 = vrot.slane %v151, 4
    %v160 = vadd.f32 %v151, %v159
    %v161 = vrot.slane %v160, 2
    %v162 = vadd.f32 %v160, %v161
    %v163 = vrot.slane %v162, 1
    %v164 = vadd.f32 %v162, %v163
    %v165 = vrot.slane %v152, 4
    %v166 = vadd.f32 %v152, %v165
    %v167 = vrot.slane %v166, 2
    %v168 = vadd.f32 %v166, %v167
    %v169 = vrot.slane %v168, 1
    %v170 = vadd.f32 %v168, %v169
    %v171 = vrot.slane %v153, 4
    %v172 = vadd.f32 %v153, %v171
    %v173 = vrot.slane %v172, 2
    %v174 = vadd.f32 %v172, %v173
    %v175 = vrot.slane %v174, 1
    %v176 = vadd.f32 %v174, %v175
    %v177 = vrot.slane %v154, 4
    %v178 = vadd.f32 %v154, %v177
    %v179 = vrot.slane %v178, 2
    %v180 = vadd.f32 %v178, %v179
    %v181 = vrot.slane %v180, 1
    %v182 = vadd.f32 %v180, %v181
    %v183 = vrot.slane %v155, 4
    %v184 = vadd.f32 %v155, %v183
    %v185 = vrot.slane %v184, 2
    %v186 = vadd.f32 %v184, %v185
    %v187 = vrot.slane %v186, 1
    %v188 = vadd.f32 %v186, %v187
    %v189 = vrot.slane %v156, 4
    %v190 = vadd.f32 %v156, %v189
    %v191 = vrot.slane %v190, 2
    %v192 = vadd.f32 %v190, %v191
    %v193 = vrot.slane %v192, 1
    %v194 = vadd.f32 %v192, %v193
    %v195 = vrot.slane %v157, 4
    %v196 = vadd.f32 %v157, %v195
    %v197 = vrot.slane %v196, 2
    %v198 = vadd.f32 %v196, %v197
    %v199 = vrot.slane %v198, 1
    %v200 = vadd.f32 %v198, %v199
    %v201 = vrot.slane %v158, 4
    %v202 = vadd.f32 %v158, %v201
    %v203 = vrot.slane %v202, 2
    %v204 = vadd.f32 %v202, %v203
    %v205 = vrot.slane %v204, 1
    %v206 = vadd.f32 %v204, %v205
    %v207 = vmul.f32 %v164, 0.125
    %v208 = vmul.f32 %v170, 0.125
    %v209 = vmul.f32 %v176, 0.125
    %v210 = vmul.f32 %v182, 0.125
    %v211 = vmul.f32 %v188, 0.125
    %v212 = vmul.f32 %v194, 0.125
    %v213 = vmul.f32 %v200, 0.125
    %v214 = vmul.f32 %v206, 0.125
    %v215 = vld [vmem:[#allocation8] sm:$0xf]
    %v216 = vld [vmem:[#allocation8 + $0x4] sm:$0xf]
    %v217 = vld [vmem:[#allocation8 + $0x8] sm:$0xf]
    %v218 = vld [vmem:[#allocation8 + $0xc] sm:$0xf]
    %v219 = vld [vmem:[#allocation8 + $0x10] sm:$0xf]
    %v220 = vld [vmem:[#allocation8 + $0x14] sm:$0xf]
    %v221 = vld [vmem:[#allocation8 + $0x18] sm:$0xf]
    %v222 = vld [vmem:[#allocation8 + $0x1c] sm:$0xf]
    %v223 = vld [vmem:[#allocation8 + $0x20] sm:$0xf]
    %v224 = vld [vmem:[#allocation8 + $0x24] sm:$0xf]
    %v225 = vld [vmem:[#allocation8 + $0x28] sm:$0xf]
    %v226 = vld [vmem:[#allocation8 + $0x2c] sm:$0xf]
    %v227 = vld [vmem:[#allocation8 + $0x30] sm:$0xf]
    %v228 = vld [vmem:[#allocation8 + $0x34] sm:$0xf]
    %v229 = vld [vmem:[#allocation8 + $0x38] sm:$0xf]
    %v230 = vld [vmem:[#allocation8 + $0x3c] sm:$0xf]
    %v247 = vunpack.c.l.b16 %v215
    %v248 = vunpack.c.l.b16 %v216
    %v249 = vunpack.c.l.b16 %v217
    %v250 = vunpack.c.l.b16 %v218
    %v251 = vunpack.c.l.b16 %v219
    %v252 = vunpack.c.l.b16 %v220
    %v253 = vunpack.c.l.b16 %v221
    %v254 = vunpack.c.l.b16 %v222
    %v255 = vunpack.c.l.b16 %v223
    %v256 = vunpack.c.l.b16 %v224
    %v257 = vunpack.c.l.b16 %v225
    %v258 = vunpack.c.l.b16 %v226
    %v259 = vunpack.c.l.b16 %v227
    %v260 = vunpack.c.l.b16 %v228
    %v261 = vunpack.c.l.b16 %v229
    %v262 = vunpack.c.l.b16 %v230
    %v263 = vpack.c.b16 %v248, %v247
    %v264 = vpack.c.b16 %v250, %v249
    %v265 = vpack.c.b16 %v252, %v251
    %v266 = vpack.c.b16 %v254, %v253
    %v267 = vpack.c.b16 %v256, %v255
    %v268 = vpack.c.b16 %v258, %v257
    %v269 = vpack.c.b16 %v260, %v259
    %v270 = vpack.c.b16 %v262, %v261
    %279 = vmatpush.bf16.msra.mxu0 %v270
    %280 = vmatpush.bf16.msra.mxu0 %v269
    %281 = vmatpush.bf16.msra.mxu0 %v268
    %282 = vmatpush.bf16.msra.mxu0 %v267
    %283 = vmatpush.bf16.msra.mxu0 %v266
    %284 = vmatpush.bf16.msra.mxu0 %v265
    %285 = vmatpush.bf16.msra.mxu0 %v264
    %286 = vmatpush.bf16.msra.mxu0 %v263
    %287 = vmatmul.bf16.gmra.mxu0 %v149
    %v288 = vpop.f32.mrf.mxu0
    %v289 = vadd.f32 0.0, %v288
    %v290 = vpop.f32.mrf.mxu0
    %291 = vdwg.mxu0
    %v292 = vld [vmem:[#allocation10] sm:$0xf]
    %v293 = vld [vmem:[#allocation10 + $0x4] sm:$0xf]
    %v294 = vld [vmem:[#allocation10 + $0x8] sm:$0xf]
    %v295 = vld [vmem:[#allocation10 + $0xc] sm:$0xf]
    %v296 = vld [vmem:[#allocation10 + $0x10] sm:$0xf]
    %v297 = vld [vmem:[#allocation10 + $0x14] sm:$0xf]
    %v298 = vld [vmem:[#allocation10 + $0x18] sm:$0xf]
    %v299 = vld [vmem:[#allocation10 + $0x1c] sm:$0xf]
    %v300 = vld [vmem:[#allocation10 + $0x20] sm:$0xf]
    %v301 = vld [vmem:[#allocation10 + $0x24] sm:$0xf]
    %v302 = vld [vmem:[#allocation10 + $0x28] sm:$0xf]
    %v303 = vld [vmem:[#allocation10 + $0x2c] sm:$0xf]
    %v304 = vld [vmem:[#allocation10 + $0x30] sm:$0xf]
    %v305 = vld [vmem:[#allocation10 + $0x34] sm:$0xf]
    %v306 = vld [vmem:[#allocation10 + $0x38] sm:$0xf]
    %v307 = vld [vmem:[#allocation10 + $0x3c] sm:$0xf]
    %v316 = vunpack.c.l.b16 %v141
    %v317 = vunpack.c.l.b16 %v142
    %v318 = vunpack.c.l.b16 %v143
    %v319 = vunpack.c.l.b16 %v144
    %v320 = vunpack.c.l.b16 %v145
    %v321 = vunpack.c.l.b16 %v146
    %v322 = vunpack.c.l.b16 %v147
    %v323 = vunpack.c.l.b16 %v148
    %v324 = vpack.c.b16 %v317, %v316
    %v325 = vpack.c.b16 %v319, %v318
    %v326 = vpack.c.b16 %v321, %v320
    %v327 = vpack.c.b16 %v323, %v322
    %v348 = vunpack.c.l.b16 %v292
    %v349 = vunpack.c.l.b16 %v293
    %v350 = vunpack.c.l.b16 %v294
    %v351 = vunpack.c.l.b16 %v295
    %v352 = vunpack.c.l.b16 %v296
    %v353 = vunpack.c.l.b16 %v297
    %v354 = vunpack.c.l.b16 %v298
    %v355 = vunpack.c.l.b16 %v299
    %v356 = vunpack.c.l.b16 %v300
    %v357 = vunpack.c.l.b16 %v301
    %v358 = vunpack.c.l.b16 %v302
    %v359 = vunpack.c.l.b16 %v303
    %v360 = vunpack.c.l.b16 %v304
    %v361 = vunpack.c.l.b16 %v305
    %v362 = vunpack.c.l.b16 %v306
    %v363 = vunpack.c.l.b16 %v307
    %v364 = vpack.c.b16 %v349, %v348
    %v365 = vpack.c.b16 %v351, %v350
    %v366 = vpack.c.b16 %v353, %v352
    %v367 = vpack.c.b16 %v355, %v354
    %v368 = vpack.c.b16 %v357, %v356
    %v369 = vpack.c.b16 %v359, %v358
    %v370 = vpack.c.b16 %v361, %v360
    %v371 = vpack.c.b16 %v363, %v362
    %380 = vmatpush.bf16.msra.mxu0 %v371
    %381 = vmatpush.bf16.msra.mxu0 %v370
    %382 = vmatpush.bf16.msra.mxu0 %v369
    %383 = vmatpush.bf16.msra.mxu0 %v368
    %384 = vmatpush.bf16.msra.mxu0 %v367
    %385 = vmatpush.bf16.msra.mxu0 %v366
    %386 = vmatpush.bf16.msra.mxu0 %v365
    %387 = vmatpush.bf16.msra.mxu0 %v364
    %388 = vmatmul.bf16.gmra.mxu0 %v324
    %v389 = vpop.f32.mrf.mxu0
    %v390 = vadd.f32 0.0, %v389
    %v391 = vpop.f32.mrf.mxu0
    %v392 = vadd.f32 0.0, %v391
    %393 = vmatmul.bf16.gmra.mxu0 %v325
    %v394 = vpop.f32.mrf.mxu0
    %v395 = vadd.f32 0.0, %v394
    %v396 = vpop.f32.mrf.mxu0
    %v397 = vadd.f32 0.0, %v396
    %398 = vmatmul.bf16.gmra.mxu0 %v326
    %v399 = vpop.f32.mrf.mxu0
    %v400 = vadd.f32 0.0, %v399
    %v401 = vpop.f32.mrf.mxu0
    %v402 = vadd.f32 0.0, %v401
    %403 = vmatmul.bf16.gmra.mxu0 %v327
    %v404 = vpop.f32.mrf.mxu0
    %v405 = vadd.f32 0.0, %v404
    %v406 = vpop.f32.mrf.mxu0
    %v407 = vadd.f32 0.0, %v406
    %408 = vdwg.mxu0
    %v409 = vld [vmem:[#allocation11] sm:$0xf]
    %v410 = vld [vmem:[#allocation11 + $0x4] sm:$0xf]
    %v411 = vld [vmem:[#allocation11 + $0x8] sm:$0xf]
    %v412 = vld [vmem:[#allocation11 + $0xc] sm:$0xf]
    %v413 = vld [vmem:[#allocation11 + $0x10] sm:$0xf]
    %v414 = vld [vmem:[#allocation11 + $0x14] sm:$0xf]
    %v415 = vld [vmem:[#allocation11 + $0x18] sm:$0xf]
    %v416 = vld [vmem:[#allocation11 + $0x1c] sm:$0xf]
    %v417 = vld [vmem:[#allocation11 + $0x20] sm:$0xf]
    %v418 = vld [vmem:[#allocation11 + $0x24] sm:$0xf]
    %v419 = vld [vmem:[#allocation11 + $0x28] sm:$0xf]
    %v420 = vld [vmem:[#allocation11 + $0x2c] sm:$0xf]
    %v421 = vld [vmem:[#allocation11 + $0x30] sm:$0xf]
    %v422 = vld [vmem:[#allocation11 + $0x34] sm:$0xf]
    %v423 = vld [vmem:[#allocation11 + $0x38] sm:$0xf]
    %v424 = vld [vmem:[#allocation11 + $0x3c] sm:$0xf]
    %v441 = vunpack.c.l.b16 %v409
    %v442 = vunpack.c.l.b16 %v410
    %v443 = vunpack.c.l.b16 %v411
    %v444 = vunpack.c.l.b16 %v412
    %v445 = vunpack.c.l.b16 %v413
    %v446 = vunpack.c.l.b16 %v414
    %v447 = vunpack.c.l.b16 %v415
    %v448 = vunpack.c.l.b16 %v416
    %v449 = vunpack.c.l.b16 %v417
    %v450 = vunpack.c.l.b16 %v418
    %v451 = vunpack.c.l.b16 %v419
    %v452 = vunpack.c.l.b16 %v420
    %v453 = vunpack.c.l.b16 %v421
    %v454 = vunpack.c.l.b16 %v422
    %v455 = vunpack.c.l.b16 %v423
    %v456 = vunpack.c.l.b16 %v424
    %v457 = vpack.c.b16 %v442, %v441
    %v458 = vpack.c.b16 %v444, %v443
    %v459 = vpack.c.b16 %v446, %v445
    %v460 = vpack.c.b16 %v448, %v447
    %v461 = vpack.c.b16 %v450, %v449
    %v462 = vpack.c.b16 %v452, %v451
    %v463 = vpack.c.b16 %v454, %v453
    %v464 = vpack.c.b16 %v456, %v455
    %473 = vmatpush.bf16.msra.mxu0 %v464
    %474 = vmatpush.bf16.msra.mxu0 %v463
    %475 = vmatpush.bf16.msra.mxu0 %v462
    %476 = vmatpush.bf16.msra.mxu0 %v461
    %477 = vmatpush.bf16.msra.mxu0 %v460
    %478 = vmatpush.bf16.msra.mxu0 %v459
    %479 = vmatpush.bf16.msra.mxu0 %v458
    %480 = vmatpush.bf16.msra.mxu0 %v457
    %481 = vmatmul.bf16.gmra.mxu0 %v324
    %v482 = vpop.f32.mrf.mxu0
    %v483 = vadd.f32 0.0, %v482
    %v484 = vpop.f32.mrf.mxu0
    %v485 = vadd.f32 0.0, %v484
    %486 = vmatmul.bf16.gmra.mxu0 %v325
    %v487 = vpop.f32.mrf.mxu0
    %v488 = vadd.f32 0.0, %v487
    %v489 = vpop.f32.mrf.mxu0
    %v490 = vadd.f32 0.0, %v489
    %491 = vmatmul.bf16.gmra.mxu0 %v326
    %v492 = vpop.f32.mrf.mxu0
    %v493 = vadd.f32 0.0, %v492
    %v494 = vpop.f32.mrf.mxu0
    %v495 = vadd.f32 0.0, %v494
    %496 = vmatmul.bf16.gmra.mxu0 %v327
    %v497 = vpop.f32.mrf.mxu0
    %v498 = vadd.f32 0.0, %v497
    %v499 = vpop.f32.mrf.mxu0
    %v500 = vadd.f32 0.0, %v499
    %501 = vdwg.mxu0
    %v503 = vrot.slane %v289, 1
    %v504 = vrot.slane %v289, 2
    %v505 = vrot.slane %v289, 3
    %v506 = vrot.slane %v289, 4
    %v507 = vrot.slane %v289, 5
    %v508 = vrot.slane %v289, 6
    %v509 = vrot.slane %v289, 7
    %v510 = vperm.slane %v289, 0
    %v511 = vperm.slane %v503, 0
    %v512 = vperm.slane %v504, 0
    %v513 = vperm.slane %v505, 0
    %v514 = vperm.slane %v506, 0
    %v515 = vperm.slane %v507, 0
    %v516 = vperm.slane %v508, 0
    %v517 = vperm.slane %v509, 0
    %v526 = vmul.f32 %v510, %v390
    %v527 = vmul.f32 %v511, %v392
    %v528 = vmul.f32 %v512, %v395
    %v529 = vmul.f32 %v513, %v397
    %v530 = vmul.f32 %v514, %v400
    %v531 = vmul.f32 %v515, %v402
    %v532 = vmul.f32 %v516, %v405
    %v533 = vmul.f32 %v517, %v407
    %534 = vadd.xlane.f32.xlu0 %v526
    %v535 = vpop.xlane.xlu0 %534
    %536 = vadd.xlane.f32.xlu0 %v527
    %v537 = vpop.xlane.xlu0 %536
    %538 = vadd.xlane.f32.xlu0 %v528
    %v539 = vpop.xlane.xlu0 %538
    %540 = vadd.xlane.f32.xlu0 %v529
    %v541 = vpop.xlane.xlu0 %540
    %542 = vadd.xlane.f32.xlu0 %v530
    %v543 = vpop.xlane.xlu0 %542
    %544 = vadd.xlane.f32.xlu0 %v531
    %v545 = vpop.xlane.xlu0 %544
    %546 = vadd.xlane.f32.xlu0 %v532
    %v547 = vpop.xlane.xlu0 %546
    %548 = vadd.xlane.f32.xlu0 %v533
    %v549 = vpop.xlane.xlu0 %548
    %v550 = vmul.f32 %v535, 0.17677669
    %v551 = vmul.f32 %v537, 0.17677669
    %v552 = vmul.f32 %v539, 0.17677669
    %v553 = vmul.f32 %v541, 0.17677669
    %v554 = vmul.f32 %v543, 0.17677669
    %v555 = vmul.f32 %v545, 0.17677669
    %v556 = vmul.f32 %v547, 0.17677669
    %v557 = vmul.f32 %v549, 0.17677669
    %v559 = vperm.slane %v150, 0
    %v560 = vlaneseq
    %v561 = vshrl.u32 %v560, 7
    %563 = vset.pattern.permute.xlu0 %v561
    %564 = vperm.xlu0 %563, %v559
    %v565 = vpop.permute.xlu0 %564
    %v566 = vperm.slane %v150, 1
    %v567 = vlaneseq
    %v568 = vshrl.u32 %v567, 7
    %570 = vset.pattern.permute.xlu0 %v568
    %571 = vperm.xlu0 %570, %v566
    %v572 = vpop.permute.xlu0 %571
    %v573 = vperm.slane %v150, 2
    %v574 = vlaneseq
    %v575 = vshrl.u32 %v574, 7
    %577 = vset.pattern.permute.xlu0 %v575
    %578 = vperm.xlu0 %577, %v573
    %v579 = vpop.permute.xlu0 %578
    %v580 = vperm.slane %v150, 3
    %v581 = vlaneseq
    %v582 = vshrl.u32 %v581, 7
    %584 = vset.pattern.permute.xlu0 %v582
    %585 = vperm.xlu0 %584, %v580
    %v586 = vpop.permute.xlu0 %585
    %v587 = vperm.slane %v150, 4
    %v588 = vlaneseq
    %v589 = vshrl.u32 %v588, 7
    %591 = vset.pattern.permute.xlu0 %v589
    %592 = vperm.xlu0 %591, %v587
    %v593 = vpop.permute.xlu0 %592
    %v594 = vperm.slane %v150, 5
    %v595 = vlaneseq
    %v596 = vshrl.u32 %v595, 7
    %598 = vset.pattern.permute.xlu0 %v596
    %599 = vperm.xlu0 %598, %v594
    %v600 = vpop.permute.xlu0 %599
    %v601 = vperm.slane %v150, 6
    %v602 = vlaneseq
    %v603 = vshrl.u32 %v602, 7
    %605 = vset.pattern.permute.xlu0 %v603
    %606 = vperm.xlu0 %605, %v601
    %v607 = vpop.permute.xlu0 %606
    %v608 = vperm.slane %v150, 7
    %v609 = vlaneseq
    %v610 = vshrl.u32 %v609, 7
    %612 = vset.pattern.permute.xlu0 %v610
    %613 = vperm.xlu0 %612, %v608
    %v614 = vpop.permute.xlu0 %613
    %v623 = vadd.f32 %v550, %v565
    %v624 = vadd.f32 %v551, %v572
    %v625 = vadd.f32 %v552, %v579
    %v626 = vadd.f32 %v553, %v586
    %v627 = vadd.f32 %v554, %v593
    %v628 = vadd.f32 %v555, %v600
    %v629 = vadd.f32 %v556, %v607
    %v630 = vadd.f32 %v557, %v614
    %639 = vset.pattern.permute.xlu0 0
    %640 = vperm.xlu0 %639, %v623
    %v641 = vpop.permute.xlu0 %640
    %642 = vset.pattern.permute.xlu0 0
    %643 = vperm.xlu0 %642, %v624
    %v644 = vpop.permute.xlu0 %643
    %645 = vset.pattern.permute.xlu0 0
    %646 = vperm.xlu0 %645, %v625
    %v647 = vpop.permute.xlu0 %646
    %648 = vset.pattern.permute.xlu0 0
    %649 = vperm.xlu0 %648, %v626
    %v650 = vpop.permute.xlu0 %649
    %651 = vset.pattern.permute.xlu0 0
    %652 = vperm.xlu0 %651, %v627
    %v653 = vpop.permute.xlu0 %652
    %654 = vset.pattern.permute.xlu0 0
    %655 = vperm.xlu0 %654, %v628
    %v656 = vpop.permute.xlu0 %655
    %657 = vset.pattern.permute.xlu0 0
    %658 = vperm.xlu0 %657, %v629
    %v659 = vpop.permute.xlu0 %658
    %660 = vset.pattern.permute.xlu0 0
    %661 = vperm.xlu0 %660, %v630
    %v662 = vpop.permute.xlu0 %661
    %v663 = vlaneseq
    %v664 = vand.u32 %v663, 127
    %v665 = vperm.slane %v641, %v664
    %v666 = vperm.slane %v644, %v664
    %v667 = vperm.slane %v647, %v664
    %v668 = vperm.slane %v650, %v664
    %v669 = vperm.slane %v653, %v664
    %v670 = vperm.slane %v656, %v664
    %v671 = vperm.slane %v659, %v664
    %v672 = vperm.slane %v662, %v664
    %vm673 = vcmask 1041409
    %v674 = vsel %vm673, %v666, %v665
    %vm675 = vcmask 1042434
    %v676 = vsel %vm675, %v667, %v674
    %vm677 = vcmask 1043459
    %v678 = vsel %vm677, %v668, %v676
    %vm679 = vcmask 1044484
    %v680 = vsel %vm679, %v669, %v678
    %vm681 = vcmask 1045509
    %v682 = vsel %vm681, %v670, %v680
    %vm683 = vcmask 1046534
    %v684 = vsel %vm683, %v671, %v682
    %vm685 = vcmask 1047559
    %v686 = vsel %vm685, %v672, %v684
    %vm688 = vcmask 64512
    %v689 = vsel %vm688, %v686, -inf
    %690 = vmax.xlane.f32.xlu0 %v689
    %v691 = vpop.xlane.xlu0 %690
    %v693 = vperm.slane %v691, 0
    %v694 = vperm.slane %v691, 1
    %v695 = vperm.slane %v691, 2
    %v696 = vperm.slane %v691, 3
    %v697 = vperm.slane %v691, 4
    %v698 = vperm.slane %v691, 5
    %v699 = vperm.slane %v691, 6
    %v700 = vperm.slane %v691, 7
    %v709 = vsub.f32 %v623, %v693
    %v710 = vsub.f32 %v624, %v694
    %v711 = vsub.f32 %v625, %v695
    %v712 = vsub.f32 %v626, %v696
    %v713 = vsub.f32 %v627, %v697
    %v714 = vsub.f32 %v628, %v698
    %v715 = vsub.f32 %v629, %v699
    %v716 = vsub.f32 %v630, %v700
    %v717 = vmul.f32 %v709, 1.442695
    %v718 = vpow.pop %v717
    %v719 = vmul.f32 %v710, 1.442695
    %v720 = vpow.pop %v719
    %v721 = vmul.f32 %v711, 1.442695
    %v722 = vpow.pop %v721
    %v723 = vmul.f32 %v712, 1.442695
    %v724 = vpow.pop %v723
    %v725 = vmul.f32 %v713, 1.442695
    %v726 = vpow.pop %v725
    %v727 = vmul.f32 %v714, 1.442695
    %v728 = vpow.pop %v727
    %v729 = vmul.f32 %v715, 1.442695
    %v730 = vpow.pop %v729
    %v731 = vmul.f32 %v716, 1.442695
    %v732 = vpow.pop %v731
    %741 = vset.pattern.permute.xlu0 0
    %742 = vperm.xlu0 %741, %v718
    %v743 = vpop.permute.xlu0 %742
    %744 = vset.pattern.permute.xlu0 0
    %745 = vperm.xlu0 %744, %v720
    %v746 = vpop.permute.xlu0 %745
    %747 = vset.pattern.permute.xlu0 0
    %748 = vperm.xlu0 %747, %v722
    %v749 = vpop.permute.xlu0 %748
    %750 = vset.pattern.permute.xlu0 0
    %751 = vperm.xlu0 %750, %v724
    %v752 = vpop.permute.xlu0 %751
    %753 = vset.pattern.permute.xlu0 0
    %754 = vperm.xlu0 %753, %v726
    %v755 = vpop.permute.xlu0 %754
    %756 = vset.pattern.permute.xlu0 0
    %757 = vperm.xlu0 %756, %v728
    %v758 = vpop.permute.xlu0 %757
    %759 = vset.pattern.permute.xlu0 0
    %760 = vperm.xlu0 %759, %v730
    %v761 = vpop.permute.xlu0 %760
    %762 = vset.pattern.permute.xlu0 0
    %763 = vperm.xlu0 %762, %v732
    %v764 = vpop.permute.xlu0 %763
    %v765 = vperm.slane %v743, %v664
    %v766 = vperm.slane %v746, %v664
    %v767 = vperm.slane %v749, %v664
    %v768 = vperm.slane %v752, %v664
    %v769 = vperm.slane %v755, %v664
    %v770 = vperm.slane %v758, %v664
    %v771 = vperm.slane %v761, %v664
    %v772 = vperm.slane %v764, %v664
    %v773 = vsel %vm673, %v766, %v765
    %v774 = vsel %vm675, %v767, %v773
    %v775 = vsel %vm677, %v768, %v774
    %v776 = vsel %vm679, %v769, %v775
    %v777 = vsel %vm681, %v770, %v776
    %v778 = vsel %vm683, %v771, %v777
    %v779 = vsel %vm685, %v772, %v778
    %v781 = vsel %vm688, %v779, 0.0
    %782 = vadd.xlane.f32.xlu0 %v781
    %v783 = vpop.xlane.xlu0 %782
    %v784 = vrcp.pop %v783
    %v786 = vperm.slane %v784, 0
    %v787 = vperm.slane %v784, 1
    %v788 = vperm.slane %v784, 2
    %v789 = vperm.slane %v784, 3
    %v790 = vperm.slane %v784, 4
    %v791 = vperm.slane %v784, 5
    %v792 = vperm.slane %v784, 6
    %v793 = vperm.slane %v784, 7
    %v802 = vmul.f32 %v718, %v786
    %v803 = vmul.f32 %v720, %v787
    %v804 = vmul.f32 %v722, %v788
    %v805 = vmul.f32 %v724, %v789
    %v806 = vmul.f32 %v726, %v790
    %v807 = vmul.f32 %v728, %v791
    %v808 = vmul.f32 %v730, %v792
    %v809 = vmul.f32 %v732, %v793
    %811 = vset.pattern.permute.xlu0 0
    %812 = vperm.xlu0 %811, %v802
    %v813 = vpop.permute.xlu0 %812
    %816 = vset.pattern.permute.xlu0 0
    %817 = vperm.xlu0 %816, %v803
    %v818 = vpop.permute.xlu0 %817
    %821 = vset.pattern.permute.xlu0 0
    %822 = vperm.xlu0 %821, %v804
    %v823 = vpop.permute.xlu0 %822
    %826 = vset.pattern.permute.xlu0 0
    %827 = vperm.xlu0 %826, %v805
    %v828 = vpop.permute.xlu0 %827
    %831 = vset.pattern.permute.xlu0 0
    %832 = vperm.xlu0 %831, %v806
    %v833 = vpop.permute.xlu0 %832
    %836 = vset.pattern.permute.xlu0 0
    %837 = vperm.xlu0 %836, %v807
    %v838 = vpop.permute.xlu0 %837
    %841 = vset.pattern.permute.xlu0 0
    %842 = vperm.xlu0 %841, %v808
    %v843 = vpop.permute.xlu0 %842
    %846 = vset.pattern.permute.xlu0 0
    %847 = vperm.xlu0 %846, %v809
    %v848 = vpop.permute.xlu0 %847
    %v850 = vmul.f32 %v813, %v483
    %v851 = vmul.f32 %v818, %v485
    %v852 = vmul.f32 %v823, %v488
    %v853 = vmul.f32 %v828, %v490
    %v854 = vmul.f32 %v833, %v493
    %v855 = vmul.f32 %v838, %v495
    %v856 = vmul.f32 %v843, %v498
    %v857 = vmul.f32 %v848, %v500
    %v858 = vrot.slane %v850, 4
    %v859 = vadd.f32 %v850, %v858
    %v860 = vrot.slane %v859, 2
    %v861 = vadd.f32 %v859, %v860
    %v862 = vrot.slane %v861, 1
    %v863 = vadd.f32 %v861, %v862
    %v864 = vrot.slane %v851, 4
    %v865 = vadd.f32 %v851, %v864
    %v866 = vrot.slane %v865, 2
    %v867 = vadd.f32 %v865, %v866
    %v868 = vrot.slane %v867, 1
    %v869 = vadd.f32 %v867, %v868
    %v870 = vrot.slane %v852, 4
    %v871 = vadd.f32 %v852, %v870
    %v872 = vrot.slane %v871, 2
    %v873 = vadd.f32 %v871, %v872
    %v874 = vrot.slane %v873, 1
    %v875 = vadd.f32 %v873, %v874
    %v876 = vrot.slane %v853, 4
    %v877 = vadd.f32 %v853, %v876
    %v878 = vrot.slane %v877, 2
    %v879 = vadd.f32 %v877, %v878
    %v880 = vrot.slane %v879, 1
    %v881 = vadd.f32 %v879, %v880
    %v882 = vrot.slane %v854, 4
    %v883 = vadd.f32 %v854, %v882
    %v884 = vrot.slane %v883, 2
    %v885 = vadd.f32 %v883, %v884
    %v886 = vrot.slane %v885, 1
    %v887 = vadd.f32 %v885, %v886
    %v888 = vrot.slane %v855, 4
    %v889 = vadd.f32 %v855, %v888
    %v890 = vrot.slane %v889, 2
    %v891 = vadd.f32 %v889, %v890
    %v892 = vrot.slane %v891, 1
    %v893 = vadd.f32 %v891, %v892
    %v894 = vrot.slane %v856, 4
    %v895 = vadd.f32 %v856, %v894
    %v896 = vrot.slane %v895, 2
    %v897 = vadd.f32 %v895, %v896
    %v898 = vrot.slane %v897, 1
    %v899 = vadd.f32 %v897, %v898
    %v900 = vrot.slane %v857, 4
    %v901 = vadd.f32 %v857, %v900
    %v902 = vrot.slane %v901, 2
    %v903 = vadd.f32 %v901, %v902
    %v904 = vrot.slane %v903, 1
    %v905 = vadd.f32 %v903, %v904
    %v906 = vpack.c.bf16 %v863, %v863
    %v907 = vpack.c.bf16 %v869, %v869
    %v908 = vpack.c.bf16 %v875, %v875
    %v909 = vpack.c.bf16 %v881, %v881
    %v910 = vpack.c.bf16 %v887, %v887
    %v911 = vpack.c.bf16 %v893, %v893
    %v912 = vpack.c.bf16 %v899, %v899
    %v913 = vpack.c.bf16 %v905, %v905
    %v914 = vld [vmem:[#allocation13] sm:$0xf]
    %v915 = vld [vmem:[#allocation13 + $0x4] sm:$0xf]
    %v916 = vld [vmem:[#allocation13 + $0x8] sm:$0xf]
    %v917 = vld [vmem:[#allocation13 + $0xc] sm:$0xf]
    %v918 = vld [vmem:[#allocation13 + $0x10] sm:$0xf]
    %v919 = vld [vmem:[#allocation13 + $0x14] sm:$0xf]
    %v920 = vld [vmem:[#allocation13 + $0x18] sm:$0xf]
    %v921 = vld [vmem:[#allocation13 + $0x1c] sm:$0xf]
    %v922 = vld [vmem:[#allocation13 + $0x20] sm:$0xf]
    %v923 = vld [vmem:[#allocation13 + $0x24] sm:$0xf]
    %v924 = vld [vmem:[#allocation13 + $0x28] sm:$0xf]
    %v925 = vld [vmem:[#allocation13 + $0x2c] sm:$0xf]
    %v926 = vld [vmem:[#allocation13 + $0x30] sm:$0xf]
    %v927 = vld [vmem:[#allocation13 + $0x34] sm:$0xf]
    %v928 = vld [vmem:[#allocation13 + $0x38] sm:$0xf]
    %v929 = vld [vmem:[#allocation13 + $0x3c] sm:$0xf]
    %v930 = vld [vmem:[%s7] sm:$0x1]
    %v932 = vperm.slane %v930, 0
    %v942 = vunpack.c.l.b16 %v906
    %v943 = vunpack.c.l.b16 %v907
    %v944 = vunpack.c.l.b16 %v908
    %v945 = vunpack.c.l.b16 %v909
    %v946 = vunpack.c.l.b16 %v910
    %v947 = vunpack.c.l.b16 %v911
    %v948 = vunpack.c.l.b16 %v912
    %v949 = vunpack.c.l.b16 %v913
    %v950 = vsel %vm673, %v943, %v942
    %v951 = vsel %vm675, %v944, %v950
    %v952 = vsel %vm677, %v945, %v951
    %v953 = vsel %vm679, %v946, %v952
    %v954 = vsel %vm681, %v947, %v953
    %v955 = vsel %vm683, %v948, %v954
    %v956 = vsel %vm685, %v949, %v955
    %v957 = vpack.c.b16 %v956, %v956
    %v975 = vunpack.c.l.b16 %v914
    %v976 = vunpack.c.l.b16 %v915
    %v977 = vunpack.c.l.b16 %v916
    %v978 = vunpack.c.l.b16 %v917
    %v979 = vunpack.c.l.b16 %v918
    %v980 = vunpack.c.l.b16 %v919
    %v981 = vunpack.c.l.b16 %v920
    %v982 = vunpack.c.l.b16 %v921
    %v983 = vunpack.c.l.b16 %v922
    %v984 = vunpack.c.l.b16 %v923
    %v985 = vunpack.c.l.b16 %v924
    %v986 = vunpack.c.l.b16 %v925
    %v987 = vunpack.c.l.b16 %v926
    %v988 = vunpack.c.l.b16 %v927
    %v989 = vunpack.c.l.b16 %v928
    %v990 = vunpack.c.l.b16 %v929
    %v991 = vpack.c.b16 %v976, %v975
    %v992 = vpack.c.b16 %v978, %v977
    %v993 = vpack.c.b16 %v980, %v979
    %v994 = vpack.c.b16 %v982, %v981
    %v995 = vpack.c.b16 %v984, %v983
    %v996 = vpack.c.b16 %v986, %v985
    %v997 = vpack.c.b16 %v988, %v987
    %v998 = vpack.c.b16 %v990, %v989
    %1007 = vmatpush.bf16.msra.mxu0 %v998
    %1008 = vmatpush.bf16.msra.mxu0 %v997
    %1009 = vmatpush.bf16.msra.mxu0 %v996
    %1010 = vmatpush.bf16.msra.mxu0 %v995
    %1011 = vmatpush.bf16.msra.mxu0 %v994
    %1012 = vmatpush.bf16.msra.mxu0 %v993
    %1013 = vmatpush.bf16.msra.mxu0 %v992
    %1014 = vmatpush.bf16.msra.mxu0 %v991
    %1015 = vmatmul.bf16.gmra.mxu0 %v957
    %v1016 = vpop.f32.mrf.mxu0
    %v1017 = vadd.f32 %v932, %v1016
    %v1018 = vpop.f32.mrf.mxu0
    %1019 = vdwg.mxu0
    %v1028 = vsel %vm673, %v208, %v207
    %v1029 = vsel %vm675, %v209, %v1028
    %v1030 = vsel %vm677, %v210, %v1029
    %v1031 = vsel %vm679, %v211, %v1030
    %v1032 = vsel %vm681, %v212, %v1031
    %v1033 = vsel %vm683, %v213, %v1032
    %v1034 = vsel %vm685, %v214, %v1033
    %v1036 = vadd.f32 %v1017, %v1034
    %1037 = vadd.xlane.f32.xlu0 %v1036
    %v1038 = vpop.xlane.xlu0 %1037
    %v1039 = vmul.f32 %v1038, 0.03125
    %v1040 = vsub.f32 %v1036, %v1039
    %vm1041 = vcmp.lt.s32.totalorder %v664, 32
    %v1042 = vsel %vm1041, 1, 0
    %vm1043 = vcmp.eq.s32.totalorder %v1042, 1
    %v1044 = vsel %vm1043, %v1040, 0.0
    %v1045 = vmul.f32 %v1044, %v1044
    %1046 = vadd.xlane.f32.xlu0 %v1045
    %v1047 = vpop.xlane.xlu0 %1046
    %v1048 = vmul.f32 %v1047, 0.03125
    %v1049 = vadd.f32 %v1048, 1e-06
    %v1050 = vrsqrt.pop %v1049
    %v1051 = vmul.f32 %v1050, %v1049
    %v1052 = vmul.f32 %v1051, %v1050
    %v1053 = vmul.f32 0.5, %v1052
    %v1054 = vsub.f32 1.5, %v1053
    %v1055 = vmul.f32 %v1050, %v1054
    %vm1056 = vweird.f32 %v1049
    %vm1057 = vweird.f32 %v1050
    %vm1058 = vmor %vm1056, %vm1057
    %v1059 = vsel %vm1058, %v1050, %v1055
    %v1060 = vmul.f32 %v1044, %v1059
    %v1061 = vld [vmem:[%s8] sm:$0x1]
    %v1063 = vperm.slane %v1061, 0
    %v1065 = vmul.f32 %v1060, %v1063
    %v1066 = vld [vmem:[%s9] sm:$0x1]
    %v1068 = vperm.slane %v1066, 0
    %v1070 = vadd.f32 %v1065, %v1068
    %1071 = vst [vmem:[#allocation14] sm:$0xff] %v1070
    // Predicated region
    $region70: #{tpu_custom_call.1} parent=1 // pred_check
      _
    $region71: #{tpu_custom_call.1} parent=1 // pred_check_branch
      %1073 = sbr.rel (0) target = $region73
    $region72: #{tpu_custom_call.1} parent=1 // pred_region
      %1075 = vsyncadd [#allocation4], 0
      %s1077 = sshll.u32 [#allocation14], 4
      %s1078 = int_to_ptr.vmem [resolvable:$true] %s1077
      %s1079 = sshll.u32 %s10, 4
      %s1080 = int_to_ptr.hbm [resolvable:$true] %s1079
      %1082 = dma.vmem_to_hbm [thread:$0]  %s1078, 128, %s1080, [#allocation4]
    $region73: #{tpu_custom_call.1} parent=1 // pred_fallthru
      _
    // Predicated region
    $region74: #{tpu_custom_call.1} parent=1 // pred_check
      _
    $region75: #{tpu_custom_call.1} parent=1 // pred_check_branch
      %1084 = sbr.rel (0) target = $region77
    $region76: #{tpu_custom_call.1} parent=1 // pred_region
      %1086 = dma.done [#allocation4], 128
    $region77: #{tpu_custom_call.1} parent=1 // pred_fallthru
      _
    %1087 = vsyncpa [#allocation3], 1
    %1088 = vsyncpa [#allocation6], 1
    %1089 = vsyncpa [#allocation9], 1
    %1090 = vsyncpa [#allocation12], 1
    %1091 = vsyncpa [#allocation4], 1

</llo_original>
